<compile_context>
chip_gen: v6e
topology: v6e:2x2x1
jax: 0.10.0
libtpu: 0.0.40
codegen_flags: <defaults>
</compile_context>

<pallas_src>
import functools
import math

import jax
import jax.numpy as jnp
from jax.experimental import pallas as pl
from jax.experimental.pallas import tpu as pltpu


def _rmsnorm_kernel(x_ref, w_ref, o_ref, *, eps):
    """One (tile_rows, hidden) block of RMSNorm.

    x_ref : (tile, H) input block (model dtype)
    w_ref : (1, H)    weight, resident across all grid steps
    o_ref : (tile, H) output block (promoted dtype of weight * normed)
    """
    x = x_ref[...].astype(jnp.float32)
    var = jnp.mean(x * x, axis=-1, keepdims=True)
    normed = (x * jax.lax.rsqrt(var + eps)).astype(x_ref.dtype)
    o_ref[...] = (w_ref[...] * normed).astype(o_ref.dtype)


def _sublane_granule(dtype):
    # f32 -> 8, bf16 -> 16, int8/fp8 -> 32 rows per packed sublane group.
    return max(8, 32 // jnp.dtype(dtype).itemsize)


@functools.partial(jax.jit, static_argnames=("eps", "block_rows"))
def rmsnorm(hidden_states, weight, eps=1e-6, block_rows=None):
    orig_shape = hidden_states.shape
    H = orig_shape[-1]
    rows = math.prod(orig_shape[:-1]) if len(orig_shape) > 1 else 1
    x2 = hidden_states.reshape(rows, H)
    out_dtype = jnp.result_type(weight.dtype, hidden_states.dtype)

    # Sublane packing granularity so multi-block row tiles never need masked
    # partial stores for sub-32-bit dtypes.
    g = max(_sublane_granule(hidden_states.dtype), _sublane_granule(out_dtype))

    if block_rows is None:
        # ~4 MiB of f32-equivalent per row tile: double-buffered in + out
        # blocks plus the in-kernel f32 temporaries stay under the 32 MiB
        # scoped-VMEM limit below, even in the all-f32 worst case.
        target_bytes = 4 << 20
        block_rows = max(g, (target_bytes // (H * 4)) // g * g)
    else:
        block_rows = max(g, (int(block_rows) + g - 1) // g * g)

    if rows <= block_rows:
        tile = rows          # single block == full array dim (no constraints)
    else:
        tile = block_rows    # multiple of g (>= 8); ragged edge is masked

    out = pl.pallas_call(
        functools.partial(_rmsnorm_kernel, eps=eps),
        out_shape=jax.ShapeDtypeStruct((rows, H), out_dtype),
        grid_spec=pl.GridSpec(
            grid=(pl.cdiv(rows, tile),),
            in_specs=[
                pl.BlockSpec((tile, H), lambda i: (i, 0)),
                pl.BlockSpec((1, H), lambda i: (0, 0)),
            ],
            out_specs=pl.BlockSpec((tile, H), lambda i: (i, 0)),
        ),
        compiler_params=pltpu.CompilerParams(
            dimension_semantics=("parallel",),
            vmem_limit_bytes=32 * 1024 * 1024,
        ),
    )(x2, weight.reshape(1, H))

    return out.reshape(orig_shape[:-1] + (H,))


class InternLM2RMSNorm:
    """JAX/Pallas equivalent of the PyTorch module (forward pass only)."""

    def __init__(self, hidden_size, eps=1e-6, dtype=jnp.float32):
        self.weight = jnp.ones((hidden_size,), dtype=dtype)
        self.variance_epsilon = float(eps)

    def __call__(self, hidden_states):
        return rmsnorm(hidden_states, self.weight, eps=self.variance_epsilon)


def _reference(hidden_states, weight, eps):
    x = hidden_states.astype(jnp.float32)
    var = jnp.mean(x * x, axis=-1, keepdims=True)
    x = x * jax.lax.rsqrt(var + eps)
    return weight * x.astype(hidden_states.dtype)


if __name__ == "__main__":
    key = jax.random.PRNGKey(0)
    kx, kw, kx2, kx3 = jax.random.split(key, 4)

    batch, seq, hidden = 2, 8, 128

    # float32 path (single full-extent block)
    x = jax.random.normal(kx, (batch, seq, hidden), dtype=jnp.float32)
    norm = InternLM2RMSNorm(hidden, eps=1e-6)
    # non-trivial weight so the elementwise scale is actually exercised
    norm.weight = 1.0 + 0.1 * jax.random.normal(kw, (hidden,), dtype=jnp.float32)
    out = jax.block_until_ready(norm(x))
    ref = _reference(x, norm.weight, norm.variance_epsilon)
    assert out.shape == x.shape and out.dtype == x.dtype
    assert jnp.allclose(out, ref, atol=1e-5, rtol=1e-5)

    # bfloat16 path (f32 accumulation inside the kernel, cast back like PyTorch)
    xb = jax.random.normal(kx2, (batch, seq, hidden), dtype=jnp.float32).astype(
        jnp.bfloat16
    )
    wb = norm.weight.astype(jnp.bfloat16)
    outb = jax.block_until_ready(rmsnorm(xb, wb, eps=1e-6))
    refb = _reference(xb, wb, 1e-6)
    assert outb.shape == xb.shape and outb.dtype == jnp.bfloat16
    assert jnp.allclose(
        outb.astype(jnp.float32), refb.astype(jnp.float32), atol=2e-2, rtol=2e-2
    )

    # multi-block path with a ragged (masked) last tile: 21 rows, 8-row tiles
    xr = jax.random.normal(kx3, (3, 7, hidden), dtype=jnp.float32)
    outr = jax.block_until_ready(
        rmsnorm(xr, norm.weight, eps=1e-6, block_rows=8)
    )
    refr = _reference(xr, norm.weight, 1e-6)
    assert outr.shape == xr.shape and outr.dtype == xr.dtype
    assert jnp.allclose(outr, refr, atol=1e-5, rtol=1e-5)

    print("KERNEL_OK")
</pallas_src>

<mosaic_0001>
module attributes {stable_mosaic.version = 11 : i64} {
  func.func @_rmsnorm_kernel(%arg0: i32, %arg1: memref<16x128xf32, #tpu.memory_space<vmem>>, %arg2: memref<1x128xf32, #tpu.memory_space<vmem>>, %arg3: memref<16x128xf32, #tpu.memory_space<vmem>>) attributes {dimension_semantics = [#tpu.dimension_semantics<parallel>], iteration_bounds = array<i64: 1>, scalar_prefetch = 0 : i64, scratch_operands = 0 : i64, tpu.core_type = #tpu.core_type<tc>, window_params = [{transform_indices = @transform_0, window_bounds = array<i64: 16, 128>}, {pipeline_mode = #tpu.pipeline_mode<synchronous>, transform_indices = @transform_1, window_bounds = array<i64: 1, 128>}, {transform_indices = @transform_2, window_bounds = array<i64: 16, 128>}]} {
    %c0 = arith.constant 0 : index
    %c0_0 = arith.constant 0 : index
    %0 = vector.load %arg1[%c0, %c0_0] : memref<16x128xf32, #tpu.memory_space<vmem>>, vector<16x128xf32>
    %1 = arith.mulf %0, %0 : vector<16x128xf32>
    %cst = arith.constant dense<0.000000e+00> : vector<16xf32>
    %2 = vector.multi_reduction <add>, %1, %cst [1] : vector<16x128xf32> to vector<16xf32>
    %3 = vector.shape_cast %2 : vector<16xf32> to vector<16x1xf32>
    %cst_1 = arith.constant 1.280000e+02 : f32
    %4 = vector.broadcast %cst_1 : f32 to vector<16x1xf32>
    %5 = arith.divf %3, %4 : vector<16x1xf32>
    %cst_2 = arith.constant 9.99999997E-7 : f32
    %6 = vector.broadcast %cst_2 : f32 to vector<16x1xf32>
    %7 = arith.addf %5, %6 : vector<16x1xf32>
    %8 = math.rsqrt %7 : vector<16x1xf32>
    %9 = vector.broadcast %8 : vector<16x1xf32> to vector<16x128xf32>
    %10 = arith.mulf %0, %9 : vector<16x128xf32>
    %c0_3 = arith.constant 0 : index
    %c0_4 = arith.constant 0 : index
    %11 = vector.load %arg2[%c0_3, %c0_4] : memref<1x128xf32, #tpu.memory_space<vmem>>, vector<1x128xf32>
    %12 = vector.broadcast %11 : vector<1x128xf32> to vector<16x128xf32>
    %13 = arith.mulf %12, %10 : vector<16x128xf32>
    %c0_5 = arith.constant 0 : index
    %c0_6 = arith.constant 0 : index
    %14 = vector.load %arg3[%c0_5, %c0_6] : memref<16x128xf32, #tpu.memory_space<vmem>>, vector<16x128xf32>
    tpu.vector_store %arg3[%c0_5, %c0_6], %13 {strides = array<i32>} : memref<16x128xf32, #tpu.memory_space<vmem>>, vector<16x128xf32>,
    return
  }
  func.func @transform_0(%arg0: i32) -> (i32, i32) {
    %c0_i32 = arith.constant 0 : i32
    %c0_i32_0 = arith.constant 0 : i32
    return %arg0, %c0_i32 : i32, i32
  }
  func.func @transform_1(%arg0: i32) -> (i32, i32) {
    %c0_i32 = arith.constant 0 : i32
    %c0_i32_0 = arith.constant 0 : i32
    %c0_i32_1 = arith.constant 0 : i32
    return %c0_i32, %c0_i32_0 : i32, i32
  }
  func.func @transform_2(%arg0: i32) -> (i32, i32) {
    %c0_i32 = arith.constant 0 : i32
    %c0_i32_0 = arith.constant 0 : i32
    return %arg0, %c0_i32 : i32, i32
  }
}

</mosaic_0001>

<llo_original>
// kernel: rmsnorm.1
$region0: #{rmsnorm.1}
  #allocation0 [shape = 'u32[]', space=smem, size = 0x4, offset = 0x4, fixed_abs, tag = 'smem constant byte address 0x4 - core index']
  #allocation1 [shape = 'u32[144,128]{1,0:T(1,128)}', space=vmem, size = 0x12000, scoped, tag = 'internal scratch']
  %s0 = inlined_call_operand.hbm [shape: f32[16,128], index: 0, kind: input, shape index: {}]
  %s1 = inlined_call_operand.vmem [shape: f32[1,128], index: 1, kind: input, shape index: {}]
  %s2 = inlined_call_operand.hbm [shape: f32[16,128], index: 2, kind: output, shape index: {}]
  %s3 = sld [smem:[#allocation0]]
  $region22: #{rmsnorm.1} parent=0
    _
  %s5 = ssub.s32 1, %s3
  %s6 = scalar_select 0, %s5, %s3
  $region1: #{rmsnorm.1} parent=0
    #allocation2 [shape = 'u8[8192]{0}', space=vmem, size = 0x2000, scoped, tag = 'input window, operand 0, single buffered']
    #allocation3 [shape = 's32[1]{0}', space=sflag, size = 0x4, scoped, tag = 'scoped memory for rmsnorm.1']
    #allocation4 [shape = 's32[1]{0}', space=sflag, size = 0x4, scoped, tag = 'scoped memory for rmsnorm.1']
    #allocation5 [shape = 'u8[8192]{0}', space=vmem, size = 0x2000, scoped, tag = 'output window, operand 0, single buffered']
    %7 = vsyncpa [#allocation3], 0
    %8 = vsyncpa [#allocation4], 0
    // Predicated region
    $region2: #{rmsnorm.1} parent=1 // pred_check
      _
    $region3: #{rmsnorm.1} parent=1 // pred_check_branch
      %10 = sbr.rel (0) target = $region5
    $region4: #{rmsnorm.1} parent=1 // pred_region
      %s12 = ssub.s32 256, 256
      %13 = vsyncadd [#allocation3], %s12
      %s14 = sshll.u32 [#allocation2], 4
      %s15 = int_to_ptr.vmem [resolvable:$true] %s14
      %20 = dma.hbm_to_vmem [thread:$0]  %s0, 256, %s15, [#allocation3], 128, 128, 8
    $region5: #{rmsnorm.1} parent=1 // pred_fallthru
      _
    // Predicated region
    $region6: #{rmsnorm.1} parent=1 // pred_check
      _
    $region7: #{rmsnorm.1} parent=1 // pred_check_branch
      %22 = sbr.rel (0) target = $region9
    $region8: #{rmsnorm.1} parent=1 // pred_region
      _
    $region9: #{rmsnorm.1} parent=1 // pred_fallthru
      _
    // Predicated region
    $region10: #{rmsnorm.1} parent=1 // pred_check
      _
    $region11: #{rmsnorm.1} parent=1 // pred_check_branch
      %24 = sbr.rel (0) target = $region13
    $region12: #{rmsnorm.1} parent=1 // pred_region
      %25 = dma.done [#allocation3], 256
    $region13: #{rmsnorm.1} parent=1 // pred_fallthru
      _
    %v26 = vld [vmem:[#allocation2] sm:$0xff]
    %v27 = vld [vmem:[#allocation2 + $0x8] sm:$0xff]
    %v28 = vmul.f32 %v26, %v26
    %v29 = vmul.f32 %v27, %v27
    %30 = vadd.xlane.f32.xlu0 %v28
    %v31 = vpop.xlane.xlu0 %30
    %32 = vadd.xlane.f32.xlu0 %v29
    %v33 = vpop.xlane.xlu0 %32
    %v34 = vrcp.pop 128.0
    %v35 = vmul.f32 %v31, %v34
    %v36 = vmul.f32 %v33, %v34
    %v37 = vadd.f32 %v35, 1e-06
    %v38 = vadd.f32 %v36, 1e-06
    %v39 = vrsqrt.pop %v37
    %v40 = vrsqrt.pop %v38
    %v41 = vmul.f32 %v26, %v39
    %v42 = vmul.f32 %v27, %v40
    %v43 = vld [vmem:[%s1] sm:$0x1]
    %v45 = vlaneseq
    %v46 = vshrl.u32 %v45, 7
    %v47 = vsub.s32 0, %v46
    %v48 = vrot.slane %v43, %v47
    %v50 = vmul.f32 %v48, %v41
    %v51 = vmul.f32 %v48, %v42
    %52 = vst [vmem:[#allocation5] sm:$0xff] %v50
    %53 = vst [vmem:[#allocation5 + $0x8] sm:$0xff] %v51
    // Predicated region
    $region14: #{rmsnorm.1} parent=1 // pred_check
      _
    $region15: #{rmsnorm.1} parent=1 // pred_check_branch
      %55 = sbr.rel (0) target = $region17
    $region16: #{rmsnorm.1} parent=1 // pred_region
      %s57 = ssub.s32 256, 256
      %58 = vsyncadd [#allocation4], %s57
      %s59 = sshll.u32 [#allocation5], 4
      %s60 = int_to_ptr.vmem [resolvable:$true] %s59
      %65 = dma.vmem_to_hbm [thread:$0]  %s60, 256, %s2, [#allocation4], 128, 128, 8
    $region17: #{rmsnorm.1} parent=1 // pred_fallthru
      _
    // Predicated region
    $region18: #{rmsnorm.1} parent=1 // pred_check
      _
    $region19: #{rmsnorm.1} parent=1 // pred_check_branch
      %67 = sbr.rel (0) target = $region21
    $region20: #{rmsnorm.1} parent=1 // pred_region
      %68 = dma.done [#allocation4], 256
    $region21: #{rmsnorm.1} parent=1 // pred_fallthru
      _
    %69 = vsyncpa [#allocation3], 1
    %70 = vsyncpa [#allocation4], 1

</llo_original>
